<compile_context>
chip_gen: v7x
topology: tpu7x:2x2x1
jax: 0.10.0
libtpu: 0.0.40
codegen_flags: <defaults>
</compile_context>

<pallas_src>
import jax
import jax.numpy as jnp
from jax.experimental import pallas as pl
from jax.experimental.pallas import tpu as pltpu

NEG_SLOPE = 0.4
PACK = 8  # rows packed per lane-dense "view row" (8*D = 128 lanes for D=16)


def _leaky_relu(v):
    return jnp.where(v > 0, v, NEG_SLOPE * v)


def _cond_upsampler_kernel(x_ref, w1t_ref, b1_ref, w2t_ref, b2_ref, o_ref):
    # x_ref  : [tile_p, PACK*C]          (natural row-major, 8 rows per view-row)
    # w1t_ref: [PACK*C, PACK*H]  = kron(I8, W1^T)   b1_ref: [1, PACK*H]
    # w2t_ref: [PACK*H, PACK*D]  = kron(I8, W2^T)   b2_ref: [1, PACK*D]
    # o_ref  : [tile_p, PACK*D]          (128-lane-dense output view)
    x = x_ref[...]
    h = jnp.dot(x, w1t_ref[...], preferred_element_type=jnp.float32)
    h = _leaky_relu(h + b1_ref[...])          # [tile_p, PACK*H]
    y = jnp.dot(h, w2t_ref[...], preferred_element_type=jnp.float32)
    y = _leaky_relu(y + b2_ref[...])          # [tile_p, PACK*D]
    o_ref[...] = y.astype(o_ref.dtype)        # unmasked full-width stores


def _round_up(x, m):
    return ((x + m - 1) // m) * m


def cond_upsampler(x, w1, b1, w2, b2, *, tile_rows=32768):
    """CondUpsampler forward (target_dim > 1 branch).

    x : [B, T, cond_length]   (nn.Linear acts on the last dim)
    w1: [H, C] = linear1.weight (PyTorch [out, in] layout), H = target_dim // 2
    b1: [H]    = linear1.bias
    w2: [D, H] = linear2.weight, D = target_dim
    b2: [D]    = linear2.bias
    returns [B, T, D]
    """
    B, T, C = x.shape
    H = w1.shape[0]
    D = w2.shape[0]
    M = B * T
    itemsize = jnp.dtype(x.dtype).itemsize

    # ---- free contiguous views: [B,T,C] -> [M,C] -> [M/8, 8C] --------------
    x2 = x.reshape(M, C)
    Mp = _round_up(M, PACK)
    if Mp != M:
        # Only when B*T % 8 != 0: tiny (<=7 row) pad, one small copy.
        x2 = jnp.pad(x2, ((0, Mp - M), (0, 0)))
    P = Mp // PACK
    x_view = x2.reshape(P, PACK * C)

    # ---- block-diagonal weight copies (tiny, built once per call) ----------
    # y = x @ W^T + b per row  ==>  packed view:  x_view @ kron(I8, W^T) + tile(b, 8)
    eye = jnp.eye(PACK, dtype=w1.dtype)
    w1t_blk = jnp.kron(eye, w1.T)                       # [8C, 8H]
    w2t_blk = jnp.kron(eye, w2.T)                       # [8H, 8D]
    b1_blk = jnp.tile(b1, PACK).reshape(1, PACK * H)
    b2_blk = jnp.tile(b2, PACK).reshape(1, PACK * D)

    # ---- tile the packed-row axis ------------------------------------------
    tile_p = max(_round_up(tile_rows, PACK) // PACK, 1)
    if P <= tile_p:
        if P >= 1024:
            # Enough work: keep >=2 tiles so v7x's two TensorCores both help.
            tile_p = _round_up(-(-P // 2), PACK)
        else:
            tile_p = P          # single full-extent block (always legal)
    grid = (pl.cdiv(P, tile_p),)

    # Scoped-VMEM budget: double-buffered in+out blocks plus headroom for the
    # in-kernel f32 intermediates.  v5e's default scoped limit is only 16 MiB;
    # keep comfortably below v7x's 64 MiB physical per-TC VMEM.
    blocks_bytes = 2 * tile_p * PACK * (C + D) * itemsize
    vmem_limit = max(16 * 2**20, min(3 * blocks_bytes + (1 << 20), 56 * 2**20))

    cost = pl.CostEstimate(
        flops=2 * Mp * (C * H + H * D),
        transcendentals=0,
        bytes_accessed=(Mp * (C + D)
                        + PACK * PACK * (H * C + D * H)
                        + PACK * (H + D)) * itemsize,
    )

    out_view = pl.pallas_call(
        _cond_upsampler_kernel,
        out_shape=jax.ShapeDtypeStruct((P, PACK * D), x.dtype),
        grid=grid,
        in_specs=[
            pl.BlockSpec((tile_p, PACK * C), lambda i: (i, 0)),    # streamed x tiles
            pl.BlockSpec((PACK * C, PACK * H), lambda i: (0, 0)),  # resident weights
            pl.BlockSpec((1, PACK * H), lambda i: (0, 0)),
            pl.BlockSpec((PACK * H, PACK * D), lambda i: (0, 0)),
            pl.BlockSpec((1, PACK * D), lambda i: (0, 0)),
        ],
        out_specs=pl.BlockSpec((tile_p, PACK * D), lambda i: (i, 0)),
        compiler_params=pltpu.CompilerParams(
            dimension_semantics=("parallel",),
            vmem_limit_bytes=int(vmem_limit),
        ),
        cost_estimate=cost,
    )(x_view, w1t_blk, b1_blk, w2t_blk, b2_blk)

    out = out_view.reshape(Mp, D)          # free contiguous reshape
    if Mp != M:
        out = out[:M]
    return out.reshape(B, T, D)


def _reference(x, w1, b1, w2, b2):
    h = x @ w1.T + b1
    h = jnp.where(h > 0, h, NEG_SLOPE * h)
    y = h @ w2.T + b2
    return jnp.where(y > 0, y, NEG_SLOPE * y)


if __name__ == "__main__":
    # Module config: cond_length=32, target_dim=16 (>1 branch: 32 -> 8 -> 16)
    cond_length = 32
    target_dim = 16
    hidden = target_dim // 2

    key = jax.random.PRNGKey(0)
    kx, k1, k2, k3, k4, kx2 = jax.random.split(key, 6)

    # Deterministic synthetic params (PyTorch nn.Linear-style uniform bounds),
    # kept in the native PyTorch [out, in] layout.
    bound1 = 1.0 / (cond_length ** 0.5)
    w1 = jax.random.uniform(k1, (hidden, cond_length), jnp.float32, -bound1, bound1)
    b1 = jax.random.uniform(k2, (hidden,), jnp.float32, -bound1, bound1)
    bound2 = 1.0 / (hidden ** 0.5)
    w2 = jax.random.uniform(k3, (target_dim, hidden), jnp.float32, -bound2, bound2)
    b2 = jax.random.uniform(k4, (target_dim,), jnp.float32, -bound2, bound2)

    # Small case (single full-extent block).
    B, T = 2, 8
    x = jax.random.normal(kx, (B, T, cond_length), dtype=jnp.float32)
    out = jax.block_until_ready(cond_upsampler(x, w1, b1, w2, b2))
    ref = _reference(x, w1, b1, w2, b2)
    assert out.shape == (B, T, target_dim)
    assert jnp.allclose(out, ref, atol=1e-5, rtol=1e-5)

    # Medium case: exercises the multi-tile streamed grid, the ragged last
    # block (cdiv grid) and the B*T % 8 != 0 row-padding path.
    B2, T2 = 2, 4101
    x_big = jax.random.normal(kx2, (B2, T2, cond_length), dtype=jnp.float32)
    out_big = jax.block_until_ready(
        cond_upsampler(x_big, w1, b1, w2, b2, tile_rows=4096))
    ref_big = _reference(x_big, w1, b1, w2, b2)
    assert out_big.shape == (B2, T2, target_dim)
    assert jnp.allclose(out_big, ref_big, atol=1e-4, rtol=1e-4)

    print("KERNEL_OK")
</pallas_src>

<mosaic_0001>
module attributes {stable_mosaic.version = 11 : i64} {
  func.func @_cond_upsampler_kernel(%arg0: i32, %arg1: memref<2x256xf32, #tpu.memory_space<vmem>>, %arg2: memref<256x64xf32, #tpu.memory_space<vmem>>, %arg3: memref<1x64xf32, #tpu.memory_space<vmem>>, %arg4: memref<64x128xf32, #tpu.memory_space<vmem>>, %arg5: memref<1x128xf32, #tpu.memory_space<vmem>>, %arg6: memref<2x128xf32, #tpu.memory_space<vmem>>) attributes {dimension_semantics = [#tpu.dimension_semantics<parallel>], iteration_bounds = array<i64: 1>, scalar_prefetch = 0 : i64, scratch_operands = 0 : i64, tpu.core_type = #tpu.core_type<tc>, window_params = [{transform_indices = @transform_0, window_bounds = array<i64: 2, 256>}, {pipeline_mode = #tpu.pipeline_mode<synchronous>, transform_indices = @transform_1, window_bounds = array<i64: 256, 64>}, {pipeline_mode = #tpu.pipeline_mode<synchronous>, transform_indices = @transform_2, window_bounds = array<i64: 1, 64>}, {pipeline_mode = #tpu.pipeline_mode<synchronous>, transform_indices = @transform_3, window_bounds = array<i64: 64, 128>}, {pipeline_mode = #tpu.pipeline_mode<synchronous>, transform_indices = @transform_4, window_bounds = array<i64: 1, 128>}, {transform_indices = @transform_5, window_bounds = array<i64: 2, 128>}]} {
    %c0 = arith.constant 0 : index
    %c0_0 = arith.constant 0 : index
    %0 = vector.load %arg1[%c0, %c0_0] : memref<2x256xf32, #tpu.memory_space<vmem>>, vector<2x256xf32>
    %c0_1 = arith.constant 0 : index
    %c0_2 = arith.constant 0 : index
    %1 = vector.load %arg2[%c0_1, %c0_2] : memref<256x64xf32, #tpu.memory_space<vmem>>, vector<256x64xf32>
    %cst = arith.constant dense<0.000000e+00> : vector<2x64xf32>
    %2 = tpu.matmul %0, %1, %cst {dimension_numbers = #tpu.dot_dimension_numbers<[1], [0], [0], [1], [0, 0, 1, 1], [], []>} : vector<2x256xf32>, vector<256x64xf32>, vector<2x64xf32> -> vector<2x64xf32>
    %c0_3 = arith.constant 0 : index
    %c0_4 = arith.constant 0 : index
    %3 = vector.load %arg3[%c0_3, %c0_4] : memref<1x64xf32, #tpu.memory_space<vmem>>, vector<1x64xf32>
    %4 = vector.broadcast %3 : vector<1x64xf32> to vector<2x64xf32>
    %5 = arith.addf %2, %4 : vector<2x64xf32>
    %cst_5 = arith.constant 0.000000e+00 : f32
    %6 = vector.broadcast %cst_5 : f32 to vector<2x64xf32>
    %7 = arith.cmpf ogt, %5, %6 : vector<2x64xf32>
    %cst_6 = arith.constant 4.000000e-01 : f32
    %8 = vector.broadcast %cst_6 : f32 to vector<2x64xf32>
    %9 = arith.mulf %8, %5 : vector<2x64xf32>
    %10 = arith.select %7, %5, %9 : vector<2x64xi1>, vector<2x64xf32>
    %c0_7 = arith.constant 0 : index
    %c0_8 = arith.constant 0 : index
    %11 = vector.load %arg4[%c0_7, %c0_8] : memref<64x128xf32, #tpu.memory_space<vmem>>, vector<64x128xf32>
    %cst_9 = arith.constant dense<0.000000e+00> : vector<2x128xf32>
    %12 = tpu.matmul %10, %11, %cst_9 {dimension_numbers = #tpu.dot_dimension_numbers<[1], [0], [0], [1], [0, 0, 1, 1], [], []>} : vector<2x64xf32>, vector<64x128xf32>, vector<2x128xf32> -> vector<2x128xf32>
    %c0_10 = arith.constant 0 : index
    %c0_11 = arith.constant 0 : index
    %13 = vector.load %arg5[%c0_10, %c0_11] : memref<1x128xf32, #tpu.memory_space<vmem>>, vector<1x128xf32>
    %14 = vector.broadcast %13 : vector<1x128xf32> to vector<2x128xf32>
    %15 = arith.addf %12, %14 : vector<2x128xf32>
    %cst_12 = arith.constant 0.000000e+00 : f32
    %16 = vector.broadcast %cst_12 : f32 to vector<2x128xf32>
    %17 = arith.cmpf ogt, %15, %16 : vector<2x128xf32>
    %cst_13 = arith.constant 4.000000e-01 : f32
    %18 = vector.broadcast %cst_13 : f32 to vector<2x128xf32>
    %19 = arith.mulf %18, %15 : vector<2x128xf32>
    %20 = arith.select %17, %15, %19 : vector<2x128xi1>, vector<2x128xf32>
    %c0_14 = arith.constant 0 : index
    %c0_15 = arith.constant 0 : index
    %21 = vector.load %arg6[%c0_14, %c0_15] : memref<2x128xf32, #tpu.memory_space<vmem>>, vector<2x128xf32>
    tpu.vector_store %arg6[%c0_14, %c0_15], %20 {strides = array<i32>} : memref<2x128xf32, #tpu.memory_space<vmem>>, vector<2x128xf32>,
    return
  }
  func.func @transform_0(%arg0: i32) -> (i32, i32) {
    %c0_i32 = arith.constant 0 : i32
    %c0_i32_0 = arith.constant 0 : i32
    return %arg0, %c0_i32 : i32, i32
  }
  func.func @transform_1(%arg0: i32) -> (i32, i32) {
    %c0_i32 = arith.constant 0 : i32
    %c0_i32_0 = arith.constant 0 : i32
    %c0_i32_1 = arith.constant 0 : i32
    return %c0_i32, %c0_i32_0 : i32, i32
  }
  func.func @transform_2(%arg0: i32) -> (i32, i32) {
    %c0_i32 = arith.constant 0 : i32
    %c0_i32_0 = arith.constant 0 : i32
    %c0_i32_1 = arith.constant 0 : i32
    return %c0_i32, %c0_i32_0 : i32, i32
  }
  func.func @transform_3(%arg0: i32) -> (i32, i32) {
    %c0_i32 = arith.constant 0 : i32
    %c0_i32_0 = arith.constant 0 : i32
    %c0_i32_1 = arith.constant 0 : i32
    return %c0_i32, %c0_i32_0 : i32, i32
  }
  func.func @transform_4(%arg0: i32) -> (i32, i32) {
    %c0_i32 = arith.constant 0 : i32
    %c0_i32_0 = arith.constant 0 : i32
    %c0_i32_1 = arith.constant 0 : i32
    return %c0_i32, %c0_i32_0 : i32, i32
  }
  func.func @transform_5(%arg0: i32) -> (i32, i32) {
    %c0_i32 = arith.constant 0 : i32
    %c0_i32_0 = arith.constant 0 : i32
    return %arg0, %c0_i32 : i32, i32
  }
}

</mosaic_0001>

<llo_original>
// kernel: tpu_custom_call.1
$region0: #{tpu_custom_call.1}
  #allocation0 [shape = 'u32[]', space=smem, size = 0x4, offset = 0x4, fixed_abs, tag = 'smem constant byte address 0x4 - core index']
  #allocation1 [shape = 'u32[144,128]{1,0:T(1,128)}', space=vmem, size = 0x12000, scoped, tag = 'internal scratch']
  %s0 = inlined_call_operand.vmem [shape: f32[2,256], index: 0, kind: input, shape index: {}]
  %s1 = inlined_call_operand.vmem [shape: f32[256,64], index: 1, kind: input, shape index: {}]
  %s2 = inlined_call_operand.vmem [shape: f32[1,64], index: 2, kind: input, shape index: {}]
  %s3 = inlined_call_operand.vmem [shape: f32[64,128], index: 3, kind: input, shape index: {}]
  %s4 = inlined_call_operand.vmem [shape: f32[1,128], index: 4, kind: input, shape index: {}]
  %s5 = inlined_call_operand.hbm [shape: f32[2,128], index: 5, kind: output, shape index: {}]
  %s6 = sld [smem:[#allocation0]]
  $region30: #{tpu_custom_call.1} parent=0
    _
  %s8 = ssub.s32 1, %s6
  %s9 = scalar_select 0, %s8, %s6
  $region1: #{tpu_custom_call.1} parent=0
    #allocation2 [shape = 'u8[1024]{0}', space=vmem, size = 0x400, scoped, tag = 'output window, operand 0, single buffered']
    #allocation3 [shape = 's32[1]{0}', space=sflag, size = 0x4, scoped, tag = 'scoped memory for tpu_custom_call.1']
    %10 = vsyncpa [#allocation3], 0
    // Predicated region
    $region2: #{tpu_custom_call.1} parent=1 // pred_check
      _
    $region3: #{tpu_custom_call.1} parent=1 // pred_check_branch
      %12 = sbr.rel (0) target = $region5
    $region4: #{tpu_custom_call.1} parent=1 // pred_region
      _
    $region5: #{tpu_custom_call.1} parent=1 // pred_fallthru
      _
    // Predicated region
    $region6: #{tpu_custom_call.1} parent=1 // pred_check
      _
    $region7: #{tpu_custom_call.1} parent=1 // pred_check_branch
      %14 = sbr.rel (0) target = $region9
    $region8: #{tpu_custom_call.1} parent=1 // pred_region
      _
    $region9: #{tpu_custom_call.1} parent=1 // pred_fallthru
      _
    // Predicated region
    $region10: #{tpu_custom_call.1} parent=1 // pred_check
      _
    $region11: #{tpu_custom_call.1} parent=1 // pred_check_branch
      %16 = sbr.rel (0) target = $region13
    $region12: #{tpu_custom_call.1} parent=1 // pred_region
      _
    $region13: #{tpu_custom_call.1} parent=1 // pred_fallthru
      _
    // Predicated region
    $region14: #{tpu_custom_call.1} parent=1 // pred_check
      _
    $region15: #{tpu_custom_call.1} parent=1 // pred_check_branch
      %18 = sbr.rel (0) target = $region17
    $region16: #{tpu_custom_call.1} parent=1 // pred_region
      _
    $region17: #{tpu_custom_call.1} parent=1 // pred_fallthru
      _
    // Predicated region
    $region18: #{tpu_custom_call.1} parent=1 // pred_check
      _
    $region19: #{tpu_custom_call.1} parent=1 // pred_check_branch
      %20 = sbr.rel (0) target = $region21
    $region20: #{tpu_custom_call.1} parent=1 // pred_region
      _
    $region21: #{tpu_custom_call.1} parent=1 // pred_fallthru
      _
    %v21 = vld [vmem:[%s0] sm:$0xf]
    %v22 = vld [vmem:[%s1] sm:$0xff]
    %v23 = vld [vmem:[%s1 + $0x8] sm:$0xff]
    %v24 = vld [vmem:[%s1 + $0x10] sm:$0xff]
    %v25 = vld [vmem:[%s1 + $0x18] sm:$0xff]
    %v26 = vld [vmem:[%s1 + $0x20] sm:$0xff]
    %v27 = vld [vmem:[%s1 + $0x28] sm:$0xff]
    %v28 = vld [vmem:[%s1 + $0x30] sm:$0xff]
    %v29 = vld [vmem:[%s1 + $0x38] sm:$0xff]
    %v30 = vld [vmem:[%s1 + $0x40] sm:$0xff]
    %v31 = vld [vmem:[%s1 + $0x48] sm:$0xff]
    %v32 = vld [vmem:[%s1 + $0x50] sm:$0xff]
    %v33 = vld [vmem:[%s1 + $0x58] sm:$0xff]
    %v34 = vld [vmem:[%s1 + $0x60] sm:$0xff]
    %v35 = vld [vmem:[%s1 + $0x68] sm:$0xff]
    %v36 = vld [vmem:[%s1 + $0x70] sm:$0xff]
    %v37 = vld [vmem:[%s1 + $0x78] sm:$0xff]
    %v38 = vld [vmem:[%s1 + $0x80] sm:$0xff]
    %v39 = vld [vmem:[%s1 + $0x88] sm:$0xff]
    %v40 = vld [vmem:[%s1 + $0x90] sm:$0xff]
    %v41 = vld [vmem:[%s1 + $0x98] sm:$0xff]
    %v42 = vld [vmem:[%s1 + $0xa0] sm:$0xff]
    %v43 = vld [vmem:[%s1 + $0xa8] sm:$0xff]
    %v44 = vld [vmem:[%s1 + $0xb0] sm:$0xff]
    %v45 = vld [vmem:[%s1 + $0xb8] sm:$0xff]
    %v46 = vld [vmem:[%s1 + $0xc0] sm:$0xff]
    %v47 = vld [vmem:[%s1 + $0xc8] sm:$0xff]
    %v48 = vld [vmem:[%s1 + $0xd0] sm:$0xff]
    %v49 = vld [vmem:[%s1 + $0xd8] sm:$0xff]
    %v50 = vld [vmem:[%s1 + $0xe0] sm:$0xff]
    %v51 = vld [vmem:[%s1 + $0xe8] sm:$0xff]
    %v52 = vld [vmem:[%s1 + $0xf0] sm:$0xff]
    %v53 = vld [vmem:[%s1 + $0xf8] sm:$0xff]
    %v54 = vld [vmem:[%s2] sm:$0x1]
    %v56 = vlaneseq
    %v57 = vshrl.u32 %v56, 7
    %v58 = vsub.s32 0, %v57
    %v59 = vrot.slane %v54, %v58
    %v63 = vunpack.c.l.s4 1983009808
    %v64 = vunpack.c.0.s8 %v63
    %v65 = vlaneseq
    %v66 = vshrl.u32 %v65, 7
    %v67 = vsub.s32 %v64, %v66
    %v68 = vrot.slane %v21, %v67
    %v69 = vcombine.high %v68, %v68
    %72 = vmatprep.subr.mxu0 0.0
    %73 = vmatpush1.msra.mxu0 %v22
    %74 = vmatprep.subr.mxu0 0.0
    %75 = vmatpush1.msra.mxu0 %v23
    %76 = vmatprep.subr.mxu0 0.0
    %77 = vmatpush1.msra.mxu0 %v24
    %78 = vmatprep.subr.mxu0 0.0
    %79 = vmatpush1.msra.mxu0 %v25
    %80 = vmatprep.subr.mxu0 0.0
    %81 = vmatpush1.msra.mxu0 %v26
    %82 = vmatprep.subr.mxu0 0.0
    %83 = vmatpush1.msra.mxu0 %v27
    %84 = vmatprep.subr.mxu0 0.0
    %85 = vmatpush1.msra.mxu0 %v28
    %86 = vmatprep.subr.mxu0 0.0
    %87 = vmatpush1.msra.mxu0 %v29
    %88 = vmatprep.subr.mxu0 0.0
    %89 = vmatpush1.msra.mxu0 %v30
    %90 = vmatprep.subr.mxu0 0.0
    %91 = vmatpush1.msra.mxu0 %v31
    %92 = vmatprep.subr.mxu0 0.0
    %93 = vmatpush1.msra.mxu0 %v32
    %94 = vmatprep.subr.mxu0 0.0
    %95 = vmatpush1.msra.mxu0 %v33
    %96 = vmatprep.subr.mxu0 0.0
    %97 = vmatpush1.msra.mxu0 %v34
    %98 = vmatprep.subr.mxu0 0.0
    %99 = vmatpush1.msra.mxu0 %v35
    %100 = vmatprep.subr.mxu0 0.0
    %101 = vmatpush1.msra.mxu0 %v36
    %102 = vmatprep.subr.mxu0 0.0
    %103 = vmatpush1.msra.mxu0 %v37
    %104 = vmatprep.subr.mxu0 0.0
    %105 = vmatpush1.msra.mxu0 %v38
    %106 = vmatprep.subr.mxu0 0.0
    %107 = vmatpush1.msra.mxu0 %v39
    %108 = vmatprep.subr.mxu0 0.0
    %109 = vmatpush1.msra.mxu0 %v40
    %110 = vmatprep.subr.mxu0 0.0
    %111 = vmatpush1.msra.mxu0 %v41
    %112 = vmatprep.subr.mxu0 0.0
    %113 = vmatpush1.msra.mxu0 %v42
    %114 = vmatprep.subr.mxu0 0.0
    %115 = vmatpush1.msra.mxu0 %v43
    %116 = vmatprep.subr.mxu0 0.0
    %117 = vmatpush1.msra.mxu0 %v44
    %118 = vmatprep.subr.mxu0 0.0
    %119 = vmatpush1.msra.mxu0 %v45
    %120 = vmatprep.subr.mxu0 0.0
    %121 = vmatpush1.msra.mxu0 %v46
    %122 = vmatprep.subr.mxu0 0.0
    %123 = vmatpush1.msra.mxu0 %v47
    %124 = vmatprep.subr.mxu0 0.0
    %125 = vmatpush1.msra.mxu0 %v48
    %126 = vmatprep.subr.mxu0 0.0
    %127 = vmatpush1.msra.mxu0 %v49
    %128 = vmatprep.subr.mxu0 0.0
    %129 = vmatpush1.msra.mxu0 %v50
    %130 = vmatprep.subr.mxu0 0.0
    %131 = vmatpush1.msra.mxu0 %v51
    %132 = vmatprep.subr.mxu0 0.0
    %133 = vmatpush1.msra.mxu0 %v52
    %134 = vmatprep.subr.mxu0 0.0
    %135 = vmatpush1.msra.mxu0 %v53
    %136 = vmatprep.mubr.f32.mxu0 %v69
    %137 = vmatmul.mubr.f32.gmra.mrb[0].mxu0 %v68
    %v138 = vpop.f32.mrb[0].mxu0
    %v139 = vadd.f32 %v59, %v138
    %v140 = vpop.f32.mrb[0].mxu0
    %141 = vdwg.mxu0
    %vm142 = vcmp.gt.f32.partialorder %v139, 0.0
    %v143 = vmul.f32 %v139, 0.4
    %v144 = vsel %vm142, %v139, %v143
    %v145 = vld [vmem:[%s3] sm:$0xff]
    %v146 = vld [vmem:[%s3 + $0x8] sm:$0xff]
    %v147 = vld [vmem:[%s3 + $0x10] sm:$0xff]
    %v148 = vld [vmem:[%s3 + $0x18] sm:$0xff]
    %v149 = vld [vmem:[%s3 + $0x20] sm:$0xff]
    %v150 = vld [vmem:[%s3 + $0x28] sm:$0xff]
    %v151 = vld [vmem:[%s3 + $0x30] sm:$0xff]
    %v152 = vld [vmem:[%s3 + $0x38] sm:$0xff]
    %v153 = vld [vmem:[%s4] sm:$0x1]
    %v155 = vlaneseq
    %v156 = vshrl.u32 %v155, 7
    %v157 = vsub.s32 0, %v156
    %v158 = vrot.slane %v153, %v157
    %vm160 = vcmask 523264
    %v162 = vsel %vm160, %v144, 0
    %164 = vmatprep.subr.mxu0 0.0
    %165 = vmatpush1.msra.mxu0 %v145
    %166 = vmatprep.subr.mxu0 0.0
    %167 = vmatpush1.msra.mxu0 %v146
    %168 = vmatprep.subr.mxu0 0.0
    %169 = vmatpush1.msra.mxu0 %v147
    %170 = vmatprep.subr.mxu0 0.0
    %171 = vmatpush1.msra.mxu0 %v148
    %172 = vmatprep.subr.mxu0 0.0
    %173 = vmatpush1.msra.mxu0 %v149
    %174 = vmatprep.subr.mxu0 0.0
    %175 = vmatpush1.msra.mxu0 %v150
    %176 = vmatprep.subr.mxu0 0.0
    %177 = vmatpush1.msra.mxu0 %v151
    %178 = vmatprep.subr.mxu0 0.0
    %179 = vmatpush1.msra.mxu0 %v152
    %180 = vmatprep.subr.mxu0 0.0
    %181 = vmatpush1.msra.mxu0 0.0
    %182 = vmatprep.subr.mxu0 0.0
    %183 = vmatpush1.msra.mxu0 0.0
    %184 = vmatprep.subr.mxu0 0.0
    %185 = vmatpush1.msra.mxu0 0.0
    %186 = vmatprep.subr.mxu0 0.0
    %187 = vmatpush1.msra.mxu0 0.0
    %188 = vmatprep.subr.mxu0 0.0
    %189 = vmatpush1.msra.mxu0 0.0
    %190 = vmatprep.subr.mxu0 0.0
    %191 = vmatpush1.msra.mxu0 0.0
    %192 = vmatprep.subr.mxu0 0.0
    %193 = vmatpush1.msra.mxu0 0.0
    %194 = vmatprep.subr.mxu0 0.0
    %195 = vmatpush1.msra.mxu0 0.0
    %196 = vmatprep.subr.mxu0 0.0
    %197 = vmatpush1.msra.mxu0 0.0
    %198 = vmatprep.subr.mxu0 0.0
    %199 = vmatpush1.msra.mxu0 0.0
    %200 = vmatprep.subr.mxu0 0.0
    %201 = vmatpush1.msra.mxu0 0.0
    %202 = vmatprep.subr.mxu0 0.0
    %203 = vmatpush1.msra.mxu0 0.0
    %204 = vmatprep.subr.mxu0 0.0
    %205 = vmatpush1.msra.mxu0 0.0
    %206 = vmatprep.subr.mxu0 0.0
    %207 = vmatpush1.msra.mxu0 0.0
    %208 = vmatprep.subr.mxu0 0.0
    %209 = vmatpush1.msra.mxu0 0.0
    %210 = vmatprep.subr.mxu0 0.0
    %211 = vmatpush1.msra.mxu0 0.0
    %212 = vmatprep.subr.mxu0 0.0
    %213 = vmatpush1.msra.mxu0 0.0
    %214 = vmatprep.subr.mxu0 0.0
    %215 = vmatpush1.msra.mxu0 0.0
    %216 = vmatprep.subr.mxu0 0.0
    %217 = vmatpush1.msra.mxu0 0.0
    %218 = vmatprep.subr.mxu0 0.0
    %219 = vmatpush1.msra.mxu0 0.0
    %220 = vmatprep.subr.mxu0 0.0
    %221 = vmatpush1.msra.mxu0 0.0
    %222 = vmatprep.subr.mxu0 0.0
    %223 = vmatpush1.msra.mxu0 0.0
    %224 = vmatprep.subr.mxu0 0.0
    %225 = vmatpush1.msra.mxu0 0.0
    %226 = vmatprep.subr.mxu0 0.0
    %227 = vmatpush1.msra.mxu0 0.0
    %228 = vmatprep.mubr.f32.mxu0 0.0
    %229 = vmatmul.mubr.f32.gmra.mrb[0].mxu0 %v162
    %v230 = vpop.f32.mrb[0].mxu0
    %v231 = vadd.f32 %v158, %v230
    %v232 = vpop.f32.mrb[0].mxu0
    %233 = vdwg.mxu0
    %vm234 = vcmp.gt.f32.partialorder %v231, 0.0
    %v235 = vmul.f32 %v231, 0.4
    %v236 = vsel %vm234, %v231, %v235
    %237 = vst [vmem:[#allocation2] sm:$0x3] %v236
    // Predicated region
    $region22: #{tpu_custom_call.1} parent=1 // pred_check
      _
    $region23: #{tpu_custom_call.1} parent=1 // pred_check_branch
      %239 = sbr.rel (0) target = $region25
    $region24: #{tpu_custom_call.1} parent=1 // pred_region
      %s241 = ssub.s32 32, 32
      %242 = vsyncadd [#allocation3], %s241
      %s244 = sshll.u32 [#allocation2], 4
      %s245 = int_to_ptr.vmem [resolvable:$true] %s244
      %247 = dma.vmem_to_hbm [thread:$0]  %s245, 32, %s5, [#allocation3]
    $region25: #{tpu_custom_call.1} parent=1 // pred_fallthru
      _
    // Predicated region
    $region26: #{tpu_custom_call.1} parent=1 // pred_check
      _
    $region27: #{tpu_custom_call.1} parent=1 // pred_check_branch
      %249 = sbr.rel (0) target = $region29
    $region28: #{tpu_custom_call.1} parent=1 // pred_region
      %250 = dma.done [#allocation3], 32
    $region29: #{tpu_custom_call.1} parent=1 // pred_fallthru
      _
    %251 = vsyncpa [#allocation3], 1

</llo_original>
